<compile_context>
chip_gen: v6e
topology: v6e:2x2x1
jax: 0.10.0
libtpu: 0.0.40
codegen_flags: <defaults>
</compile_context>

<pallas_src>
import functools

import jax
import jax.numpy as jnp
from jax import lax
from jax.experimental import pallas as pl
from jax.experimental.pallas import tpu as pltpu


def _round_up(x, m):
    return ((x + m - 1) // m) * m


# ---------------------------------------------------------------------------
# Pass 1: per-pixel channel max / mean  ->  pooled (B, 2, HW) f32
# ---------------------------------------------------------------------------
def pool_kernel(x_ref, p_ref, *, C, LANE_CHUNK):
    """x_ref: (1, C, TS) native dtype; p_ref: (1, 2, TS) f32."""
    TS = x_ref.shape[2]
    n_full = C // 8
    rem = C % 8
    # bf16 max accumulator (exact for max) halves vreg count on bf16-VALU chips;
    # the mean path always accumulates in f32 (matches the reference).
    max_dtype = (jnp.bfloat16
                 if jnp.dtype(x_ref.dtype) == jnp.dtype(jnp.bfloat16)
                 else jnp.float32)

    c0 = 0
    while c0 < TS:                       # static lane chunking bounds vreg carries
        cs = min(LANE_CHUNK, TS - c0)

        max_p = None
        sum_p = None
        if n_full > 0:
            first = x_ref[0, pl.ds(0, 8), pl.ds(c0, cs)]
            init = (first.astype(max_dtype), first.astype(jnp.float32))

            def body(i, carry, c0=c0, cs=cs):
                mx, sm = carry
                blk = x_ref[0, pl.ds(pl.multiple_of(i * 8, 8), 8), pl.ds(c0, cs)]
                return (jnp.maximum(mx, blk.astype(max_dtype)),
                        sm + blk.astype(jnp.float32))

            mx, sm = lax.fori_loop(1, n_full, body, init, unroll=2)
            max_p = jnp.max(mx, axis=0, keepdims=True).astype(jnp.float32)
            sum_p = jnp.sum(sm, axis=0, keepdims=True)
        if rem > 0:
            blk = x_ref[0, pl.ds(n_full * 8, rem), pl.ds(c0, cs)]
            rmax = jnp.max(blk.astype(max_dtype), axis=0,
                           keepdims=True).astype(jnp.float32)
            rsum = jnp.sum(blk.astype(jnp.float32), axis=0, keepdims=True)
            max_p = rmax if max_p is None else jnp.maximum(max_p, rmax)
            sum_p = rsum if sum_p is None else sum_p + rsum

        p_ref[0, 0:1, pl.ds(c0, cs)] = max_p
        p_ref[0, 1:2, pl.ds(c0, cs)] = sum_p * (1.0 / C)
        c0 += cs


# ---------------------------------------------------------------------------
# Pass 2: KxK "same" conv on the pooled maps + sigmoid, broadcast over channels
# ---------------------------------------------------------------------------
def conv_bcast_kernel(b_ref, w_ref, p_ref, o_ref, qpad_ref, *,
                      W, K, HW, OFF_PAD, LANE_CHUNK):
    """b_ref: SMEM (1,) f32 bias;  w_ref: VMEM (2, K*K) f32  [ci, kh*K + kw];
       p_ref: VMEM (1, 2, HW) f32 pooled [max, avg];  o_ref: (1, TC, HW) out dtype;
       qpad_ref: VMEM (2, OFF_PAD + HW + OFF_PAD) f32 row-padded flat scratch."""
    P = (K - 1) // 2
    TC = o_ref.shape[1]

    # Stage pooled maps into the row-padded flat scratch.  The zero borders are
    # rewritten every step (cheap) so the kernel stays correct no matter how the
    # two "parallel" grid axes are split across TensorCores.
    if OFF_PAD > 0:
        zeros = jnp.zeros((2, OFF_PAD), jnp.float32)
        qpad_ref[:, pl.ds(0, OFF_PAD)] = zeros
        qpad_ref[:, pl.ds(OFF_PAD + HW, OFF_PAD)] = zeros
    qpad_ref[:, pl.ds(OFF_PAD, HW)] = p_ref[0]          # lane-aligned (OFF_PAD%128==0)

    out_dtype = o_ref.dtype
    itemsize = jnp.dtype(out_dtype).itemsize
    rows = max(8, 8 * (4 // max(1, itemsize)))           # one sublane tile of rows
    n_row_full = TC // rows
    row_rem = TC % rows
    bias = b_ref[0]

    c0 = 0
    while c0 < HW:                                       # static lane chunking
        cs = min(LANE_CHUNK, HW - c0)
        col = lax.broadcasted_iota(jnp.int32, (1, cs), 1) + c0
        col = col % W                                    # absolute column index

        # 2-in / 1-out KxK conv in the flattened domain.  Out-of-row taps land in
        # the zero borders of qpad; flat wrap-around taps are killed by the
        # per-kw column mask.  Both conv input channels ride in the sublanes of
        # a single (2, cs) slab per tap.
        acc = jnp.zeros((2, cs), jnp.float32)
        for kw in range(K):
            dw = kw - P
            part = jnp.zeros((2, cs), jnp.float32)
            for kh in range(K):
                dh = kh - P
                start = OFF_PAD + c0 + dh * W + dw       # static, >= 0
                idx = kh * K + kw
                part = part + qpad_ref[:, pl.ds(start, cs)] * w_ref[:, idx:idx + 1]
            if dw == 0:
                acc = acc + part
            else:
                valid = ((col + dw) >= 0) & ((col + dw) < W)
                acc = acc + part * valid.astype(jnp.float32)

        conv = acc[0:1, :] + acc[1:2, :] + bias           # (1, cs)
        att = jax.nn.sigmoid(conv).astype(out_dtype)      # cast once per HW

        # conv.repeat(1, C, 1, 1): same attention map for every channel.
        if n_row_full > 0:
            slab = jnp.broadcast_to(att, (rows, cs))      # hoisted out of the loop

            def store(r, _, c0=c0, cs=cs, slab=slab):
                o_ref[0, pl.ds(pl.multiple_of(r * rows, rows), rows),
                      pl.ds(c0, cs)] = slab
                return 0

            lax.fori_loop(0, n_row_full, store, 0, unroll=2)
        if row_rem > 0:
            o_ref[0, pl.ds(n_row_full * rows, row_rem), pl.ds(c0, cs)] = (
                jnp.broadcast_to(att, (row_rem, cs)))
        c0 += cs


# ---------------------------------------------------------------------------
# Tile choosers + wrapper
# ---------------------------------------------------------------------------
def _choose_spatial_tile(HW, C, itemsize, max_lanes=4096,
                         target_bytes=2 * 1024 * 1024):
    """Largest lane-aligned tile dividing HW that bounds the (1, C, ts) x block."""
    if C * HW * itemsize <= target_bytes and HW <= max_lanes:
        return HW
    best = None
    ts = 128
    while ts <= min(HW, max_lanes):
        if HW % ts == 0 and C * ts * itemsize <= target_bytes:
            best = ts
        ts += 128
    return best if best is not None else HW               # fallback: untiled


def _choose_channel_tile(C, HW, itemsize, target_bytes=8 * 1024 * 1024):
    """Largest multiple-of-8 channel tile dividing C that bounds the out block."""
    if C * HW * itemsize <= target_bytes or C <= 8:
        return C
    best = None
    tc = 8
    while tc < C:
        if C % tc == 0 and tc * HW * itemsize <= target_bytes:
            best = tc
        tc += 8
    return best if best is not None else C                 # fallback: untiled


def erm_forward(x, weight, bias, kernel_size=7):
    """x: (B, C, H, W) float; weight: (1, 2, K, K); bias: (1,)."""
    B, C, H, W = x.shape
    K = kernel_size
    assert K % 2 == 1, "Odd kernel size required"
    P = (K - 1) // 2
    HW = H * W
    itemsize = jnp.dtype(x.dtype).itemsize

    x_flat = x.reshape(B, C, HW)                           # free: row-major identical
    w2 = weight.reshape(2, K * K).astype(jnp.float32)      # [ci, kh*K + kw]
    b1 = bias.reshape(1).astype(jnp.float32)

    # ---- pass 1: pooled (B, 2, HW) f32 -----------------------------------
    TS = _choose_spatial_tile(HW, C, itemsize)
    n_s = HW // TS
    need_a = 2 * C * TS * itemsize + 2 * 2 * TS * 4 + (4 << 20)
    vmem_a = int(min(48 * 1024 * 1024, max(need_a, 32 * 1024 * 1024)))

    pooled = pl.pallas_call(
        functools.partial(pool_kernel, C=C, LANE_CHUNK=min(TS, 1024)),
        out_shape=jax.ShapeDtypeStruct((B, 2, HW), jnp.float32),
        grid_spec=pltpu.PrefetchScalarGridSpec(
            num_scalar_prefetch=0,
            grid=(B, n_s),
            in_specs=[pl.BlockSpec((1, C, TS), lambda b, s: (b, 0, s))],
            out_specs=pl.BlockSpec((1, 2, TS), lambda b, s: (b, 0, s)),
        ),
        compiler_params=pltpu.CompilerParams(
            dimension_semantics=("parallel", "parallel"),
            vmem_limit_bytes=vmem_a,
        ),
    )(x_flat)

    # ---- pass 2: conv + sigmoid, broadcast over channel tiles ------------
    OFF = P * (W + 1)                                      # flat-domain conv halo
    OFF_PAD = _round_up(OFF, 128)                          # lane-aligned head pad
    L = OFF_PAD + HW + OFF_PAD

    TC = _choose_channel_tile(C, HW, itemsize)
    n_c = C // TC
    need_b = (2 * TC * HW * itemsize + 2 * 2 * HW * 4 + 2 * L * 4
              + 2 * 2 * K * K * 4 + (4 << 20))
    vmem_b = int(min(48 * 1024 * 1024, max(need_b, 32 * 1024 * 1024)))

    out_flat = pl.pallas_call(
        functools.partial(conv_bcast_kernel, W=W, K=K, HW=HW,
                          OFF_PAD=OFF_PAD, LANE_CHUNK=min(HW, 512)),
        out_shape=jax.ShapeDtypeStruct((B, C, HW), x.dtype),
        grid_spec=pltpu.PrefetchScalarGridSpec(
            num_scalar_prefetch=0,
            grid=(B, n_c),
            in_specs=[
                pl.BlockSpec(memory_space=pltpu.MemorySpace.SMEM),   # bias
                pl.BlockSpec((2, K * K), lambda b, c: (0, 0)),       # conv weights
                pl.BlockSpec((1, 2, HW), lambda b, c: (b, 0, 0)),    # pooled (per b)
            ],
            out_specs=pl.BlockSpec((1, TC, HW), lambda b, c: (b, c, 0)),
            scratch_shapes=[pltpu.VMEM((2, L), jnp.float32)],
        ),
        compiler_params=pltpu.CompilerParams(
            dimension_semantics=("parallel", "parallel"),
            vmem_limit_bytes=vmem_b,
        ),
    )(b1, w2, pooled)

    return out_flat.reshape(B, C, H, W)


def erm_reference(x, weight, bias):
    """Pure-JAX reference matching the PyTorch forward."""
    c = x.shape[1]
    xf = x.astype(jnp.float32)
    max_pool = jnp.max(xf, axis=1, keepdims=True)
    avg_pool = jnp.mean(xf, axis=1, keepdims=True)
    pool = jnp.concatenate([max_pool, avg_pool], axis=1)   # (B, 2, H, W)
    conv = jax.lax.conv_general_dilated(
        pool, weight.astype(jnp.float32), window_strides=(1, 1), padding="SAME",
        dimension_numbers=("NCHW", "OIHW", "NCHW"),
    ) + bias.reshape(1, 1, 1, 1).astype(jnp.float32)
    conv = jnp.repeat(conv, c, axis=1)
    return jax.nn.sigmoid(conv)


if __name__ == "__main__":
    B, C, H, W = 2, 4, 16, 16
    K = 7

    key = jax.random.PRNGKey(0)
    kx, k_w, k_b = jax.random.split(key, 3)

    x = jax.random.normal(kx, (B, C, H, W), dtype=jnp.float32)
    # Deterministic synthetic conv parameters (shapes from nn.Conv2d(2, 1, 7, padding=3)).
    weight = 0.1 * jax.random.normal(k_w, (1, 2, K, K), dtype=jnp.float32)
    bias = 0.1 * jax.random.normal(k_b, (1,), dtype=jnp.float32)

    out = erm_forward(x, weight, bias, kernel_size=K)
    out = jax.block_until_ready(out)

    ref = erm_reference(x, weight, bias)
    assert out.shape == (B, C, H, W)
    err = float(jnp.max(jnp.abs(out.astype(jnp.float32) - ref)))
    assert err < 1e-5, f"max abs err {err}"

    print("KERNEL_OK")
</pallas_src>

<mosaic_0001>
module attributes {stable_mosaic.version = 11 : i64} {
  func.func @pool_kernel(%arg0: i32, %arg1: i32, %arg2: memref<1x4x256xf32, #tpu.memory_space<vmem>>, %arg3: memref<1x2x256xf32, #tpu.memory_space<vmem>>) attributes {dimension_semantics = [#tpu.dimension_semantics<parallel>, #tpu.dimension_semantics<parallel>], iteration_bounds = array<i64: 2, 1>, scalar_prefetch = 0 : i64, scratch_operands = 0 : i64, tpu.core_type = #tpu.core_type<tc>, window_params = [{transform_indices = @transform_0, window_bounds = array<i64: 1, 4, 256>}, {transform_indices = @transform_1, window_bounds = array<i64: 1, 2, 256>}]} {
    %c0 = arith.constant 0 : index
    %c0_0 = arith.constant 0 : index
    %c0_1 = arith.constant 0 : index
    %0 = vector.load %arg2[%c0, %c0_0, %c0_1] : memref<1x4x256xf32, #tpu.memory_space<vmem>>, vector<1x4x256xf32>
    %1 = vector.shape_cast %0 : vector<1x4x256xf32> to vector<4x256xf32>
    %cst = arith.constant dense<0xFF800000> : vector<256xf32>
    %2 = vector.multi_reduction <maximumf>, %1, %cst [0] : vector<4x256xf32> to vector<256xf32>
    %3 = vector.shape_cast %2 : vector<256xf32> to vector<1x256xf32>
    %cst_2 = arith.constant dense<0.000000e+00> : vector<256xf32>
    %4 = vector.multi_reduction <add>, %1, %cst_2 [0] : vector<4x256xf32> to vector<256xf32>
    %5 = vector.shape_cast %4 : vector<256xf32> to vector<1x256xf32>
    %c0_3 = arith.constant 0 : index
    %c0_4 = arith.constant 0 : index
    %c0_5 = arith.constant 0 : index
    %6 = vector.load %arg3[%c0_3, %c0_4, %c0_5] : memref<1x2x256xf32, #tpu.memory_space<vmem>>, vector<1x1x256xf32>
    %7 = vector.shape_cast %6 : vector<1x1x256xf32> to vector<1x256xf32>
    %8 = vector.shape_cast %3 : vector<1x256xf32> to vector<1x1x256xf32>
    tpu.vector_store %arg3[%c0_3, %c0_4, %c0_5], %8 {strides = array<i32>} : memref<1x2x256xf32, #tpu.memory_space<vmem>>, vector<1x1x256xf32>,
    %cst_6 = arith.constant 2.500000e-01 : f32
    %9 = vector.broadcast %cst_6 : f32 to vector<1x256xf32>
    %10 = arith.mulf %5, %9 : vector<1x256xf32>
    %c0_7 = arith.constant 0 : index
    %c1 = arith.constant 1 : index
    %c0_8 = arith.constant 0 : index
    %11 = vector.load %arg3[%c0_7, %c1, %c0_8] : memref<1x2x256xf32, #tpu.memory_space<vmem>>, vector<1x1x256xf32>
    %12 = vector.shape_cast %11 : vector<1x1x256xf32> to vector<1x256xf32>
    %13 = vector.shape_cast %10 : vector<1x256xf32> to vector<1x1x256xf32>
    tpu.vector_store %arg3[%c0_7, %c1, %c0_8], %13 {strides = array<i32>} : memref<1x2x256xf32, #tpu.memory_space<vmem>>, vector<1x1x256xf32>,
    return
  }
  func.func @transform_0(%arg0: i32, %arg1: i32) -> (i32, i32, i32) {
    %c0_i32 = arith.constant 0 : i32
    %c0_i32_0 = arith.constant 0 : i32
    return %arg0, %c0_i32, %arg1 : i32, i32, i32
  }
  func.func @transform_1(%arg0: i32, %arg1: i32) -> (i32, i32, i32) {
    %c0_i32 = arith.constant 0 : i32
    %c0_i32_0 = arith.constant 0 : i32
    return %arg0, %c0_i32, %arg1 : i32, i32, i32
  }
}

</mosaic_0001>

<llo_original>
// kernel: tpu_custom_call.1
$region0: #{tpu_custom_call.1}
  #allocation0 [shape = 'u32[]', space=smem, size = 0x4, offset = 0x4, fixed_abs, tag = 'smem constant byte address 0x4 - core index']
  #allocation1 [shape = 'u32[144,128]{1,0:T(1,128)}', space=vmem, size = 0x12000, scoped, tag = 'internal scratch']
  %s0 = inlined_call_operand.hbm [shape: f32[2,4,256], index: 0, kind: input, shape index: {}]
  %s1 = inlined_call_operand.hbm [shape: f32[2,2,256], index: 1, kind: output, shape index: {}]
  %s2 = sld [smem:[#allocation0]]
  $region41: #{tpu_custom_call.1} parent=0
    _
  %s4 = ssub.s32 1, %s2
  %s5 = scalar_select 0, %s4, %s2
  $region1: #{tpu_custom_call.1} parent=0
    #allocation2 [shape = 'u8[8192]{0}', space=vmem, size = 0x2000, scoped, tag = 'input window, operand 0']
    #allocation3 [shape = 's32[2]{0}', space=sflag, size = 0x8, scoped, tag = 'scoped memory for tpu_custom_call.1']
    #allocation4 [shape = 's32[2]{0}', space=sflag, size = 0x8, scoped, tag = 'scoped memory for tpu_custom_call.1']
    #allocation5 [shape = 'u8[4096]{0}', space=vmem, size = 0x1000, scoped, tag = 'output window, operand 0']
    %6 = vsyncpa [#allocation3], 0
    %s7 = scalar_lea.sflag [#allocation3], 1
    %8 = vsyncpa %s7, 0
    %9 = vsyncpa [#allocation4], 0
    %s10 = scalar_lea.sflag [#allocation4], 1
    %11 = vsyncpa %s10, 0
    loop: start=0, step=1, limit=4
    $region2: #{tpu_custom_call.1} parent=1 // loop_pre_header
      _
    $region3: #{tpu_custom_call.1} parent=1 // loop_header
      %s13 = sphi 0, %s17
      %p14 = scmp.ge.s32.totalorder %s13, 4
      %s20 = sphi 0, %s32
      %s21 = sphi 0, %s28
      %s22 = sphi 0, %s20
      %s23 = sphi 0, %s21
      %s24 = sphi 0, %s22
      %s25 = sphi 0, %s23
      %s37 = sphi 0, %s39
      %s40 = sphi 0, %s37
      %s41 = sphi 0, %s40
      %s57 = sphi 0, %s41
      %s65 = sphi 0, %s67
      %s68 = sphi 0, %s65
      %s69 = sphi 0, %s68
      %s85 = sphi 0, %s69
    $region4: #{tpu_custom_call.1} parent=1 // loop_header_branch
      %16 = sbr.rel (%p14) target = $region8
    $region5: #{tpu_custom_call.1} parent=1 // loop_body
      %s18 = ssub.s32 %s13, 1
      %s19 = ssub.s32 %s13, 2
      %s26 = sadd.s32 1, %s21
      %p27 = scmp.ge.s32.totalorder %s26, 1
      %s28 = scalar_select %p27, 0, %s26
      %s29 = sadd.s32 1, %s20
      %s30 = scalar_select %p27, %s29, %s20
      %p31 = scmp.ge.s32.totalorder %s30, 2
      %s32 = scalar_select %p31, 0, %s30
      %s33 = ssub.s32 %s20, %s32
      %s34 = ssub.s32 %s21, %s28
      %s35 = sor.u32 %s33, %s34
      %p36 = scmp.eq.s32.totalorder %s35, 0
      %s38 = sadd.s32 %s37, 1
      %s39 = scalar_select %p36, %s37, %s38
      %p42 = pneg %p36
      %p43 = scmp.eq.s32.totalorder %s13, 1
      %p44 = por %p42, %p43
      %p45 = scmp.ne.s32.totalorder %s37, %s40
      %p46 = scmp.eq.s32.totalorder %s13, 0
      %p47 = por %p45, %p46
      %p48 = scmp.ne.s32.totalorder %s37, %s40
      %p49 = scmp.eq.s32.totalorder %s18, 1
      %p50 = por %p48, %p49
      %p51 = scmp.ne.s32.totalorder %s40, %s41
      %p52 = scmp.eq.s32.totalorder %s18, 0
      %p53 = por %p51, %p52
      %p54 = scmp.ne.s32.totalorder %s40, %s41
      %p55 = scmp.eq.s32.totalorder %s19, 1
      %p56 = por %p54, %p55
      %p58 = scmp.ne.s32.totalorder %s41, %s57
      %p59 = scmp.eq.s32.totalorder %s19, 0
      %p60 = por %p58, %p59
      %s61 = ssub.s32 %s20, %s32
      %s62 = ssub.s32 %s21, %s28
      %s63 = sor.u32 %s61, %s62
      %p64 = scmp.eq.s32.totalorder %s63, 0
      %s66 = sadd.s32 %s65, 1
      %s67 = scalar_select %p64, %s65, %s66
      %p70 = pneg %p64
      %p71 = scmp.eq.s32.totalorder %s13, 1
      %p72 = por %p70, %p71
      %p73 = scmp.ne.s32.totalorder %s65, %s68
      %p74 = scmp.eq.s32.totalorder %s13, 0
      %p75 = por %p73, %p74
      %p76 = scmp.ne.s32.totalorder %s65, %s68
      %p77 = scmp.eq.s32.totalorder %s18, 1
      %p78 = por %p76, %p77
      %p79 = scmp.ne.s32.totalorder %s68, %s69
      %p80 = scmp.eq.s32.totalorder %s18, 0
      %p81 = por %p79, %p80
      %p82 = scmp.ne.s32.totalorder %s68, %s69
      %p83 = scmp.eq.s32.totalorder %s19, 1
      %p84 = por %p82, %p83
      %p86 = scmp.ne.s32.totalorder %s69, %s85
      %p87 = scmp.eq.s32.totalorder %s19, 0
      %p88 = por %p86, %p87
      %p89 = scmp.le.s32.totalorder 1, %s13
      %p90 = scmp.lt.s32.totalorder %s13, 3
      %p91 = pnand %p89, %p90
      %p92 = pneg %p91
      // Predicated region
      $region9: #{tpu_custom_call.1} parent=5 // pred_check
        _
      $region10: #{tpu_custom_call.1} parent=5 // pred_check_branch
        %94 = sbr.rel (%p91) target = $region12
      $region11: #{tpu_custom_call.1} parent=5 // pred_region
        %s95 = ssub.s32 %s13, 1
      $region12: #{tpu_custom_call.1} parent=5 // pred_fallthru
        _
      %p96 = scmp.lt.s32.totalorder %s13, 2
      // Predicated region
      $region13: #{tpu_custom_call.1} parent=5 // pred_check
        %p97 = pneg %p96
      $region14: #{tpu_custom_call.1} parent=5 // pred_check_branch
        %99 = sbr.rel (%p97) target = $region16
      $region15: #{tpu_custom_call.1} parent=5 // pred_region
        // Predicated region
        $region17: #{tpu_custom_call.1} parent=15 // pred_check
          %p100 = pneg %p47
        $region18: #{tpu_custom_call.1} parent=15 // pred_check_branch
          %102 = sbr.rel (%p100) target = $region20
        $region19: #{tpu_custom_call.1} parent=15 // pred_region
          %s103 = sand.u32 %s37, 1
          %s104 = scalar_lea.sflag [#allocation3], %s103
          %s105 = sand.u32 %s37, 1
          %s106 = smul.addr %s105, 8
          %s107 = scalar_lea.vmem [#allocation2], %s106
          %s108 = smul.u32 2, %s21
          %s110 = ssub.s32 128, 128
          %111 = vsyncadd %s104, %s110
          %s112 = smul.addr %s20, 2
          %s113 = sadd.s32 %s108, %s112
          %s114 = smul.addr %s113, 64
          %s115 = scalar_lea.hbm %s0, %s114
          %s117 = sshll.u32 %s107, 4
          %s118 = int_to_ptr.vmem [resolvable:$true] %s117
          %120 = dma.hbm_to_vmem [thread:$0]  %s115, 128, %s118, %s104
        $region20: #{tpu_custom_call.1} parent=15 // pred_fallthru
          _
      $region16: #{tpu_custom_call.1} parent=5 // pred_fallthru
        _
      %p121 = scmp.le.s32.totalorder 1, %s13
      %p122 = scmp.lt.s32.totalorder %s13, 3
      %p123 = pnand %p121, %p122
      %p124 = pneg %p123
      // Predicated region
      $region21: #{tpu_custom_call.1} parent=5 // pred_check
        _
      $region22: #{tpu_custom_call.1} parent=5 // pred_check_branch
        %126 = sbr.rel (%p123) target = $region24
      $region23: #{tpu_custom_call.1} parent=5 // pred_region
        %s127 = ssub.s32 %s13, 1
        %s128 = sand.u32 %s40, 1
        %s129 = scalar_lea.sflag [#allocation3], %s128
        %s130 = sand.u32 %s40, 1
        %s131 = smul.addr %s130, 8
        %s132 = scalar_lea.vmem [#allocation2], %s131
        // Predicated region
        $region25: #{tpu_custom_call.1} parent=23 // pred_check
          %p133 = pneg %p53
        $region26: #{tpu_custom_call.1} parent=23 // pred_check_branch
          %135 = sbr.rel (%p133) target = $region28
        $region27: #{tpu_custom_call.1} parent=23 // pred_region
          %136 = dma.done %s129, 128
        $region28: #{tpu_custom_call.1} parent=23 // pred_fallthru
          _
        %s137 = sand.u32 %s40, 1
        %s138 = scalar_lea.sflag [#allocation3], %s137
        %s139 = sand.u32 %s40, 1
        %s140 = smul.addr %s139, 8
        %s141 = scalar_lea.vmem [#allocation2], %s140
        %p142 = pneg %p53
        %p143 = pneg %p50
        %p144 = pneg %p81
        %p145 = pneg %p78
        %s146 = sand.u32 %s68, 1
        %s147 = scalar_lea.sflag [#allocation4], %s146
        %s148 = sand.u32 %s68, 1
        %s149 = smul.addr %s148, 4
        %s150 = scalar_lea.vmem [#allocation5], %s149
        %s151 = smul.u32 2, %s23
        %s152 = smul.u32 2, %s23
        %v153 = vld [vmem:[%s132] sm:$0xff]
        %v155 = vcombine.high %v153, %v153
        %vm157 = vcmask 1043456
        %v158 = vsel %vm157, %v153, -inf
        %v159 = vrot.slane %v158, 4
        %v160 = vmax.f32 %v158, %v159
        %v161 = vrot.slane %v160, 2
        %v162 = vmax.f32 %v160, %v161
        %v163 = vrot.slane %v162, 1
        %v164 = vmax.f32 %v162, %v163
        %v165 = vsel %vm157, %v155, -inf
        %v166 = vrot.slane %v165, 4
        %v167 = vmax.f32 %v165, %v166
        %v168 = vrot.slane %v167, 2
        %v169 = vmax.f32 %v167, %v168
        %v170 = vrot.slane %v169, 1
        %v171 = vmax.f32 %v169, %v170
        %v172 = vsel %vm157, %v153, 0.0
        %v173 = vrot.slane %v172, 4
        %v174 = vadd.f32 %v172, %v173
        %v175 = vrot.slane %v174, 2
        %v176 = vadd.f32 %v174, %v175
        %v177 = vrot.slane %v176, 1
        %v178 = vadd.f32 %v176, %v177
        %v179 = vsel %vm157, %v155, 0.0
        %v180 = vrot.slane %v179, 4
        %v181 = vadd.f32 %v179, %v180
        %v182 = vrot.slane %v181, 2
        %v183 = vadd.f32 %v181, %v182
        %v184 = vrot.slane %v183, 1
        %v185 = vadd.f32 %v183, %v184
        %v188 = vcombine.low %v164, %v171
        %v190 = vunpack.c.l.s4 1966171168
        %v191 = vunpack.c.0.s8 %v190
        %v192 = vlaneseq
        %v193 = vshrl.u32 %v192, 7
        %v194 = vsub.s32 %v191, %v193
        %v195 = vrot.slane %v188, %v194
        %v197 = vunpack.c.l.s4 1966171168
        %v198 = vunpack.c.0.s8 %v197
        %v199 = vlaneseq
        %v200 = vshrl.u32 %v199, 7
        %v201 = vsub.s32 %v198, %v200
        %v202 = vrot.slane %v195, %v201
        %v204 = vlaneseq
        %vm205 = vcmp.ge.s32.totalorder %v204, 0
        %vm206 = vcmp.lt.s32.totalorder %v204, 256
        %vm207 = vmand %vm205, %vm206
        %208 = vst.msk [vmem:[%s150] ss:$2 sm:$0x3] %vm207, %v202
        %v209 = vmul.f32 %v178, 0.25
        %v210 = vmul.f32 %v185, 0.25
        %v213 = vcombine.low %v209, %v210
        %v215 = vunpack.c.l.s4 1966171168
        %v216 = vunpack.c.0.s8 %v215
        %v217 = vlaneseq
        %v218 = vshrl.u32 %v217, 7
        %v219 = vsub.s32 %v216, %v218
        %v220 = vrot.slane %v213, %v219
        %v222 = vunpack.c.l.s4 1966171168
        %v223 = vunpack.c.0.s8 %v222
        %v224 = vlaneseq
        %v225 = vshrl.u32 %v224, 7
        %v226 = vsub.s32 %v223, %v225
        %v227 = vrot.slane %v220, %v226
        %s229 = scalar_lea.vmem %s150, 1 [#allocation5]
        %230 = vst.msk [vmem:[%s229] ss:$2 sm:$0x3] %vm207, %v227
        %s231 = sand.u32 %s68, 1
        %s232 = scalar_lea.sflag [#allocation4], %s231
        %s233 = sand.u32 %s68, 1
        %s234 = smul.addr %s233, 4
        %s235 = scalar_lea.vmem [#allocation5], %s234
        // Predicated region
        $region29: #{tpu_custom_call.1} parent=23 // pred_check
          %p236 = pneg %p78
        $region30: #{tpu_custom_call.1} parent=23 // pred_check_branch
          %238 = sbr.rel (%p236) target = $region32
        $region31: #{tpu_custom_call.1} parent=23 // pred_region
          %s239 = smul.u32 2, %s23
          %s241 = ssub.s32 64, 64
          %242 = vsyncadd %s232, %s241
          %s243 = smul.addr %s22, 2
          %s244 = sadd.s32 %s239, %s243
          %s245 = smul.addr %s244, 32
          %s246 = scalar_lea.hbm %s1, %s245
          %s248 = sshll.u32 %s235, 4
          %s249 = int_to_ptr.vmem [resolvable:$true] %s248
          %251 = dma.vmem_to_hbm [thread:$0]  %s249, 64, %s246, %s232
        $region32: #{tpu_custom_call.1} parent=23 // pred_fallthru
          _
      $region24: #{tpu_custom_call.1} parent=5 // pred_fallthru
        _
      %p252 = scmp.le.s32.totalorder 2, %s13
      // Predicated region
      $region33: #{tpu_custom_call.1} parent=5 // pred_check
        %p253 = pneg %p252
      $region34: #{tpu_custom_call.1} parent=5 // pred_check_branch
        %255 = sbr.rel (%p253) target = $region36
      $region35: #{tpu_custom_call.1} parent=5 // pred_region
        %s256 = ssub.s32 %s13, 2
        // Predicated region
        $region37: #{tpu_custom_call.1} parent=35 // pred_check
          %p257 = pneg %p84
        $region38: #{tpu_custom_call.1} parent=35 // pred_check_branch
          %259 = sbr.rel (%p257) target = $region40
        $region39: #{tpu_custom_call.1} parent=35 // pred_region
          %s260 = sand.u32 %s69, 1
          %s261 = scalar_lea.sflag [#allocation4], %s260
          %s262 = sand.u32 %s69, 1
          %s263 = smul.addr %s262, 4
          %s264 = scalar_lea.vmem [#allocation5], %s263
          %265 = dma.done %s261, 64
        $region40: #{tpu_custom_call.1} parent=35 // pred_fallthru
          _
      $region36: #{tpu_custom_call.1} parent=5 // pred_fallthru
        _
    $region6: #{tpu_custom_call.1} parent=1 // loop_footer
      %s17 = sadd.s32 1, %s13
    $region7: #{tpu_custom_call.1} parent=1 // loop_footer_branch
      %12 = sbr.rel target = $region3
    $region8: #{tpu_custom_call.1} parent=1 // loop_exit
      _
    %266 = vsyncpa [#allocation3], 1
    %s267 = scalar_lea.sflag [#allocation3], 1
    %268 = vsyncpa %s267, 1
    %269 = vsyncpa [#allocation4], 1
    %s270 = scalar_lea.sflag [#allocation4], 1
    %271 = vsyncpa %s270, 1

</llo_original>
